<compile_context>
chip_gen: v6e
topology: v6e:2x2x1
jax: 0.10.0
libtpu: 0.0.40
codegen_flags: <defaults>
</compile_context>

<pallas_src>
import functools

import jax
import jax.numpy as jnp
from jax.experimental import pallas as pl
from jax.experimental.pallas import tpu as pltpu

HIDDEN = 12
NCLASS = 2
_ROW_ALIGN = 8      # f32 sublane granularity for batch tiles
_CHUNK = 512        # rows per inner compute chunk (bounds vreg/VMEM temp pressure)


def _classify_kernel(x_ref, w1_ref, b1_ref, wd_ref, bd_ref, o_ref, *, chunk):
    """x_ref: [TB, E] f32; w1_ref: [E, 12]; b1_ref: [1, 12];
    wd_ref: [12, 1] (= (w2[1]-w2[0]).T); bd_ref: [1, 1] (= b2[1]-b2[0]);
    o_ref: [TB, 2] f32 softmax probabilities."""
    tb = x_ref.shape[0]
    n_full = tb // chunk
    rem = tb % chunk

    def process(row0, rows):
        xc = x_ref[pl.ds(row0, rows), :]
        # fc1 + ReLU, f32 accumulation on the MXU.
        h = jnp.dot(xc, w1_ref[...], preferred_element_type=jnp.float32) + b1_ref[...]
        h = jnp.maximum(h, 0.0)
        # Closed-form 2-class softmax: p1 = sigmoid(l1 - l0), p0 = 1 - p1.
        d = jnp.dot(h, wd_ref[...], preferred_element_type=jnp.float32) + bd_ref[...]
        d = jnp.clip(d, -60.0, 60.0)  # keep exp finite so approx recip never sees inf
        p1 = pl.reciprocal(1.0 + jnp.exp(-d), approx=True)   # EUP slot; err << test tol
        col = jax.lax.broadcasted_iota(jnp.int32, (rows, NCLASS), 1)
        out = jnp.where(col == 0, 1.0 - p1, p1)
        o_ref[pl.ds(row0, rows), :] = out.astype(o_ref.dtype)

    if n_full > 0:
        @pl.loop(0, n_full)
        def _(c):
            process(pl.multiple_of(c * chunk, chunk), chunk)
    if rem > 0:
        process(n_full * chunk, rem)


def _choose_batch_tile(batch, emb_dim, *, vmem_budget_bytes=20 << 20):
    """Largest 8-row-aligned batch tile whose double-buffered x tile plus the
    double-buffered output tile fit the (lane-padded) VMEM budget.

    Lane padding: any f32 buffer with minor dim < 128 occupies 128 lanes, so a
    (tb, E) tile really costs tb * max(E_pad, 128) * 4 bytes per buffer."""
    lane_e = max(128, -(-emb_dim // 128) * 128)
    per_row = 2 * 4 * lane_e + 2 * 4 * 128          # x (dbl-buf) + out (dbl-buf, lane-padded)
    resident = 2 * 4 * 128 * (-(-emb_dim // 8) * 8)  # w1 (E,12) lane-padded, dbl-buffered
    budget = max(int(vmem_budget_bytes) - resident - (2 << 20), 2 << 20)  # 2 MiB for chunk temps
    tb = max(_ROW_ALIGN, budget // per_row)
    tb = (tb // _ROW_ALIGN) * _ROW_ALIGN
    batch_aligned = -(-batch // _ROW_ALIGN) * _ROW_ALIGN
    return max(_ROW_ALIGN, min(tb, batch_aligned))


def classify_net_forward(x, w1, b1, w2, b2):
    """Classify_Net.forward: softmax(relu(x @ w1.T + b1) @ w2.T + b2, axis=-1).

    x: [B, E] f32; w1: [12, E]; b1: [12]; w2: [2, 12]; b2: [2] -> probs [B, 2] f32."""
    B, E = x.shape
    tb = _choose_batch_tile(B, E)
    chunk = min(_CHUNK, tb)
    num_tiles = pl.cdiv(B, tb)

    # Tiny weight prep (12*E / 12 / 2 elements) — negligible vs. streaming x.
    w1_t = jnp.transpose(w1).astype(jnp.float32)                       # [E, 12]
    b1_2d = b1.reshape(1, HIDDEN).astype(jnp.float32)                  # [1, 12]
    w_diff = (w2[1, :] - w2[0, :]).reshape(HIDDEN, 1).astype(jnp.float32)  # [12, 1]
    b_diff = (b2[1] - b2[0]).reshape(1, 1).astype(jnp.float32)             # [1, 1]

    kernel = functools.partial(_classify_kernel, chunk=chunk)

    return pl.pallas_call(
        kernel,
        out_shape=jax.ShapeDtypeStruct((B, NCLASS), jnp.float32),
        grid=(num_tiles,),
        in_specs=[
            pl.BlockSpec((tb, E), lambda i: (i, 0)),        # x streamed; no wrapper cast/pad
            pl.BlockSpec((E, HIDDEN), lambda i: (0, 0)),    # weights stay VMEM-resident
            pl.BlockSpec((1, HIDDEN), lambda i: (0, 0)),
            pl.BlockSpec((HIDDEN, 1), lambda i: (0, 0)),
            pl.BlockSpec((1, 1), lambda i: (0, 0)),
        ],
        out_specs=pl.BlockSpec((tb, NCLASS), lambda i: (i, 0)),
        compiler_params=pltpu.CompilerParams(
            dimension_semantics=("parallel",),      # batch tiles are independent
            vmem_limit_bytes=32 * 1024 * 1024,      # explicit (v5e scoped default is 16 MiB)
        ),
    )(x, w1_t, b1_2d, w_diff, b_diff)


def init_params(key, embedding_dim):
    """Deterministic init mimicking Classify_Net.__init__: weights ~ N(0, 0.1)."""
    k1, k2, k3, k4 = jax.random.split(key, 4)
    w1 = 0.1 * jax.random.normal(k1, (HIDDEN, embedding_dim), dtype=jnp.float32)
    b1 = 0.01 * jax.random.normal(k2, (HIDDEN,), dtype=jnp.float32)
    w2 = 0.1 * jax.random.normal(k3, (NCLASS, HIDDEN), dtype=jnp.float32)
    b2 = 0.01 * jax.random.normal(k4, (NCLASS,), dtype=jnp.float32)
    return w1, b1, w2, b2


if __name__ == "__main__":
    EMBEDDING_DIM = 32
    BATCH = 8

    key = jax.random.PRNGKey(0)
    k_x, k_p = jax.random.split(key)
    x = jax.random.normal(k_x, (BATCH, EMBEDDING_DIM), dtype=jnp.float32)
    w1, b1, w2, b2 = init_params(k_p, EMBEDDING_DIM)

    out = jax.block_until_ready(classify_net_forward(x, w1, b1, w2, b2))

    # Pure f32 reference (kernel is fully f32 now, so no bf16-rounded reference).
    ref = jax.nn.softmax(jnp.maximum(x @ w1.T + b1, 0.0) @ w2.T + b2, axis=-1)
    assert out.shape == (BATCH, NCLASS)
    assert jnp.allclose(out, ref, atol=2e-3, rtol=2e-3), float(jnp.max(jnp.abs(out - ref)))

    # Ragged batch: partial last block is handled by Pallas' masked writeback.
    x2 = jax.random.normal(jax.random.PRNGKey(1), (13, EMBEDDING_DIM), dtype=jnp.float32)
    out2 = jax.block_until_ready(classify_net_forward(x2, w1, b1, w2, b2))
    ref2 = jax.nn.softmax(jnp.maximum(x2 @ w1.T + b1, 0.0) @ w2.T + b2, axis=-1)
    assert out2.shape == (13, NCLASS)
    assert jnp.allclose(out2, ref2, atol=2e-3, rtol=2e-3), float(jnp.max(jnp.abs(out2 - ref2)))

    print("KERNEL_OK")
</pallas_src>

<mosaic_0001>
module attributes {stable_mosaic.version = 11 : i64} {
  func.func @_classify_kernel(%arg0: i32, %arg1: memref<8x32xf32, #tpu.memory_space<vmem>>, %arg2: memref<32x12xf32, #tpu.memory_space<vmem>>, %arg3: memref<1x12xf32, #tpu.memory_space<vmem>>, %arg4: memref<12x1xf32, #tpu.memory_space<vmem>>, %arg5: memref<1x1xf32, #tpu.memory_space<vmem>>, %arg6: memref<8x2xf32, #tpu.memory_space<vmem>>) attributes {dimension_semantics = [#tpu.dimension_semantics<parallel>], iteration_bounds = array<i64: 1>, scalar_prefetch = 0 : i64, scratch_operands = 0 : i64, tpu.core_type = #tpu.core_type<tc>, window_params = [{transform_indices = @transform_0, window_bounds = array<i64: 8, 32>}, {pipeline_mode = #tpu.pipeline_mode<synchronous>, transform_indices = @transform_1, window_bounds = array<i64: 32, 12>}, {pipeline_mode = #tpu.pipeline_mode<synchronous>, transform_indices = @transform_2, window_bounds = array<i64: 1, 12>}, {pipeline_mode = #tpu.pipeline_mode<synchronous>, transform_indices = @transform_3, window_bounds = array<i64: 12, 1>}, {pipeline_mode = #tpu.pipeline_mode<synchronous>, transform_indices = @transform_4, window_bounds = array<i64: 1, 1>}, {transform_indices = @transform_5, window_bounds = array<i64: 8, 2>}]} {
    %c0_i32 = arith.constant 0 : i32
    %c1_i32 = arith.constant 1 : i32
    %0 = arith.muli %c0_i32, %c1_i32 : i32
    %c0_i32_0 = arith.constant 0 : i32
    %1 = arith.addi %c0_i32_0, %0 : i32
    %c8_i32 = arith.constant 8 : i32
    %2 = arith.muli %1, %c8_i32 : i32
    %3 = tpu.assume_multiple %2, 8 : i32
    %4 = arith.index_cast %3 : i32 to index
    %c0 = arith.constant 0 : index
    %5 = vector.load %arg1[%4, %c0] : memref<8x32xf32, #tpu.memory_space<vmem>>, vector<8x32xf32>
    %c0_1 = arith.constant 0 : index
    %c0_2 = arith.constant 0 : index
    %6 = vector.load %arg2[%c0_1, %c0_2] : memref<32x12xf32, #tpu.memory_space<vmem>>, vector<32x12xf32>
    %cst = arith.constant dense<0.000000e+00> : vector<8x12xf32>
    %7 = tpu.matmul %5, %6, %cst {dimension_numbers = #tpu.dot_dimension_numbers<[1], [0], [0], [1], [0, 0, 1, 1], [], []>} : vector<8x32xf32>, vector<32x12xf32>, vector<8x12xf32> -> vector<8x12xf32>
    %c0_3 = arith.constant 0 : index
    %c0_4 = arith.constant 0 : index
    %8 = vector.load %arg3[%c0_3, %c0_4] : memref<1x12xf32, #tpu.memory_space<vmem>>, vector<1x12xf32>
    %9 = vector.broadcast %8 : vector<1x12xf32> to vector<8x12xf32>
    %10 = arith.addf %7, %9 : vector<8x12xf32>
    %cst_5 = arith.constant 0.000000e+00 : f32
    %11 = vector.broadcast %cst_5 : f32 to vector<8x12xf32>
    %12 = arith.maximumf %10, %11 : vector<8x12xf32>
    %c0_6 = arith.constant 0 : index
    %c0_7 = arith.constant 0 : index
    %13 = vector.load %arg4[%c0_6, %c0_7] : memref<12x1xf32, #tpu.memory_space<vmem>>, vector<12x1xf32>
    %cst_8 = arith.constant dense<0.000000e+00> : vector<8x1xf32>
    %14 = tpu.matmul %12, %13, %cst_8 {dimension_numbers = #tpu.dot_dimension_numbers<[1], [0], [0], [1], [0, 0, 1, 1], [], []>} : vector<8x12xf32>, vector<12x1xf32>, vector<8x1xf32> -> vector<8x1xf32>
    %c0_9 = arith.constant 0 : index
    %c0_10 = arith.constant 0 : index
    %15 = vector.load %arg5[%c0_9, %c0_10] : memref<1x1xf32, #tpu.memory_space<vmem>>, vector<1x1xf32>
    %16 = vector.broadcast %15 : vector<1x1xf32> to vector<8x1xf32>
    %17 = arith.addf %14, %16 : vector<8x1xf32>
    %cst_11 = arith.constant -6.000000e+01 : f32
    %cst_12 = arith.constant 6.000000e+01 : f32
    %18 = vector.broadcast %cst_11 : f32 to vector<8x1xf32>
    %19 = arith.maximumf %18, %17 : vector<8x1xf32>
    %20 = vector.broadcast %cst_12 : f32 to vector<8x1xf32>
    %21 = arith.minimumf %20, %19 : vector<8x1xf32>
    %cst_13 = arith.constant 0.000000e+00 : f32
    %22 = vector.broadcast %cst_13 : f32 to vector<8x1xf32>
    %23 = arith.subf %22, %21 : vector<8x1xf32>
    %24 = math.exp %23 : vector<8x1xf32>
    %cst_14 = arith.constant 1.000000e+00 : f32
    %25 = vector.broadcast %cst_14 : f32 to vector<8x1xf32>
    %26 = arith.addf %25, %24 : vector<8x1xf32>
    %27 = tpu.reciprocal %26 {approx = true} : vector<8x1xf32> -> vector<8x1xf32>
    %28 = tpu.iota {dimensions = array<i32: 1>} : vector<8x2xi32>
    %c0_i32_15 = arith.constant 0 : i32
    %29 = vector.broadcast %c0_i32_15 : i32 to vector<8x2xi32>
    %30 = arith.cmpi eq, %28, %29 : vector<8x2xi32>
    %cst_16 = arith.constant 1.000000e+00 : f32
    %31 = vector.broadcast %cst_16 : f32 to vector<8x1xf32>
    %32 = arith.subf %31, %27 : vector<8x1xf32>
    %33 = vector.shape_cast %32 : vector<8x1xf32> to vector<8x1xf32>
    %34 = vector.broadcast %33 : vector<8x1xf32> to vector<8x2xf32>
    %35 = vector.shape_cast %27 : vector<8x1xf32> to vector<8x1xf32>
    %36 = vector.broadcast %35 : vector<8x1xf32> to vector<8x2xf32>
    %37 = arith.select %30, %34, %36 : vector<8x2xi1>, vector<8x2xf32>
    %38 = arith.index_cast %3 : i32 to index
    %c0_17 = arith.constant 0 : index
    %39 = vector.load %arg6[%38, %c0_17] : memref<8x2xf32, #tpu.memory_space<vmem>>, vector<8x2xf32>
    tpu.vector_store %arg6[%38, %c0_17], %37 {strides = array<i32>} : memref<8x2xf32, #tpu.memory_space<vmem>>, vector<8x2xf32>,
    %c1_i32_18 = arith.constant 1 : i32
    return
  }
  func.func @transform_0(%arg0: i32) -> (i32, i32) {
    %c0_i32 = arith.constant 0 : i32
    %c0_i32_0 = arith.constant 0 : i32
    return %arg0, %c0_i32 : i32, i32
  }
  func.func @transform_1(%arg0: i32) -> (i32, i32) {
    %c0_i32 = arith.constant 0 : i32
    %c0_i32_0 = arith.constant 0 : i32
    %c0_i32_1 = arith.constant 0 : i32
    return %c0_i32, %c0_i32_0 : i32, i32
  }
  func.func @transform_2(%arg0: i32) -> (i32, i32) {
    %c0_i32 = arith.constant 0 : i32
    %c0_i32_0 = arith.constant 0 : i32
    %c0_i32_1 = arith.constant 0 : i32
    return %c0_i32, %c0_i32_0 : i32, i32
  }
  func.func @transform_3(%arg0: i32) -> (i32, i32) {
    %c0_i32 = arith.constant 0 : i32
    %c0_i32_0 = arith.constant 0 : i32
    %c0_i32_1 = arith.constant 0 : i32
    return %c0_i32, %c0_i32_0 : i32, i32
  }
  func.func @transform_4(%arg0: i32) -> (i32, i32) {
    %c0_i32 = arith.constant 0 : i32
    %c0_i32_0 = arith.constant 0 : i32
    %c0_i32_1 = arith.constant 0 : i32
    return %c0_i32, %c0_i32_0 : i32, i32
  }
  func.func @transform_5(%arg0: i32) -> (i32, i32) {
    %c0_i32 = arith.constant 0 : i32
    %c0_i32_0 = arith.constant 0 : i32
    return %arg0, %c0_i32 : i32, i32
  }
}

</mosaic_0001>

<llo_original>
// kernel: tpu_custom_call.1
$region0: #{tpu_custom_call.1}
  #allocation0 [shape = 'u32[]', space=smem, size = 0x4, offset = 0x4, fixed_abs, tag = 'smem constant byte address 0x4 - core index']
  #allocation1 [shape = 'u32[144,128]{1,0:T(1,128)}', space=vmem, size = 0x12000, scoped, tag = 'internal scratch']
  #allocation2 [shape = 'f32[1,1]{1,0:T(1,128)S(1)}', space=vmem, size = 0x200, scoped, tag = 'scoped memory for tpu_custom_call.1']
  %s0 = inlined_call_operand.vmem [shape: f32[8,32], index: 0, kind: input, shape index: {}]
  %s1 = inlined_call_operand.vmem [shape: f32[32,12], index: 1, kind: input, shape index: {}]
  %s2 = inlined_call_operand.vmem [shape: f32[1,12], index: 2, kind: input, shape index: {}]
  %s3 = inlined_call_operand.vmem [shape: f32[12,1], index: 3, kind: input, shape index: {}]
  %s4 = inlined_call_operand.<no memory space> [shape: f32[1,1], index: 4, kind: input, shape index: {}]
  %s5 = inlined_call_operand.vmem [shape: f32[8,2], index: 5, kind: output, shape index: {}]
  %s6 = sld [smem:[#allocation0]]
  $region30: #{tpu_custom_call.1} parent=0
    _
  %s8 = ssub.s32 1, %s6
  %s9 = scalar_select 0, %s8, %s6
  %v10 = vstv %s4
  %11 = vst [vmem:[#allocation2] sm:$0x1] %v10
  // Predicated region
  $region2: #{tpu_custom_call.1} parent=0 // pred_check
    _
  $region3: #{tpu_custom_call.1} parent=0 // pred_check_branch
    %13 = sbr.rel (0) target = $region5
  $region4: #{tpu_custom_call.1} parent=0 // pred_region
    _
  $region5: #{tpu_custom_call.1} parent=0 // pred_fallthru
    _
  // Predicated region
  $region6: #{tpu_custom_call.1} parent=0 // pred_check
    _
  $region7: #{tpu_custom_call.1} parent=0 // pred_check_branch
    %15 = sbr.rel (0) target = $region9
  $region8: #{tpu_custom_call.1} parent=0 // pred_region
    _
  $region9: #{tpu_custom_call.1} parent=0 // pred_fallthru
    _
  // Predicated region
  $region10: #{tpu_custom_call.1} parent=0 // pred_check
    _
  $region11: #{tpu_custom_call.1} parent=0 // pred_check_branch
    %17 = sbr.rel (0) target = $region13
  $region12: #{tpu_custom_call.1} parent=0 // pred_region
    _
  $region13: #{tpu_custom_call.1} parent=0 // pred_fallthru
    _
  // Predicated region
  $region14: #{tpu_custom_call.1} parent=0 // pred_check
    _
  $region15: #{tpu_custom_call.1} parent=0 // pred_check_branch
    %19 = sbr.rel (0) target = $region17
  $region16: #{tpu_custom_call.1} parent=0 // pred_region
    _
  $region17: #{tpu_custom_call.1} parent=0 // pred_fallthru
    _
  // Predicated region
  $region18: #{tpu_custom_call.1} parent=0 // pred_check
    _
  $region19: #{tpu_custom_call.1} parent=0 // pred_check_branch
    %21 = sbr.rel (0) target = $region21
  $region20: #{tpu_custom_call.1} parent=0 // pred_region
    _
  $region21: #{tpu_custom_call.1} parent=0 // pred_fallthru
    _
  %v22 = vld [vmem:[%s0] sm:$0xff]
  %v23 = vld [vmem:[%s1] sm:$0xff]
  %v24 = vld [vmem:[%s1 + $0x8] sm:$0xff]
  %v25 = vld [vmem:[%s1 + $0x10] sm:$0xff]
  %v26 = vld [vmem:[%s1 + $0x18] sm:$0xff]
  %v27 = vld [vmem:[%s2] sm:$0x1]
  %v29 = vlaneseq
  %v30 = vshrl.u32 %v29, 7
  %v31 = vsub.s32 0, %v30
  %v32 = vrot.slane %v27, %v31
  %vm34 = vcmask 261120
  %v36 = vsel %vm34, %v22, 0
  %38 = vmatprep.subr.mxu0 0.0
  %39 = vmatpush1.msra.mxu0 0.0
  %40 = vmatprep.subr.mxu0 0.0
  %41 = vmatpush1.msra.mxu0 0.0
  %42 = vmatprep.subr.mxu0 0.0
  %43 = vmatpush1.msra.mxu0 0.0
  %44 = vmatprep.subr.mxu0 0.0
  %45 = vmatpush1.msra.mxu0 0.0
  %46 = vmatprep.subr.mxu0 0.0
  %47 = vmatpush1.msra.mxu0 0.0
  %48 = vmatprep.subr.mxu0 0.0
  %49 = vmatpush1.msra.mxu0 0.0
  %50 = vmatprep.subr.mxu0 0.0
  %51 = vmatpush1.msra.mxu0 0.0
  %52 = vmatprep.subr.mxu0 0.0
  %53 = vmatpush1.msra.mxu0 0.0
  %54 = vmatprep.subr.mxu0 0.0
  %55 = vmatpush1.msra.mxu0 0.0
  %56 = vmatprep.subr.mxu0 0.0
  %57 = vmatpush1.msra.mxu0 0.0
  %58 = vmatprep.subr.mxu0 0.0
  %59 = vmatpush1.msra.mxu0 0.0
  %60 = vmatprep.subr.mxu0 0.0
  %61 = vmatpush1.msra.mxu0 0.0
  %62 = vmatprep.subr.mxu0 0.0
  %63 = vmatpush1.msra.mxu0 %v26
  %64 = vmatprep.subr.mxu0 0.0
  %65 = vmatpush1.msra.mxu0 %v25
  %66 = vmatprep.subr.mxu0 0.0
  %67 = vmatpush1.msra.mxu0 %v24
  %68 = vmatprep.subr.mxu0 0.0
  %69 = vmatpush1.msra.mxu0 %v23
  %70 = vmatprep.subr.mxu0 0.0
  %71 = vmatpush2.msra.mxu0 0.0
  %72 = vmatprep.subr.mxu0 0.0
  %73 = vmatpush2.msra.mxu0 0.0
  %74 = vmatprep.subr.mxu0 0.0
  %75 = vmatpush2.msra.mxu0 0.0
  %76 = vmatprep.subr.mxu0 0.0
  %77 = vmatpush2.msra.mxu0 0.0
  %78 = vmatprep.subr.mxu0 0.0
  %79 = vmatpush2.msra.mxu0 0.0
  %80 = vmatprep.subr.mxu0 0.0
  %81 = vmatpush2.msra.mxu0 0.0
  %82 = vmatprep.subr.mxu0 0.0
  %83 = vmatpush2.msra.mxu0 0.0
  %84 = vmatprep.subr.mxu0 0.0
  %85 = vmatpush2.msra.mxu0 0.0
  %86 = vmatprep.subr.mxu0 0.0
  %87 = vmatpush2.msra.mxu0 0.0
  %88 = vmatprep.subr.mxu0 0.0
  %89 = vmatpush2.msra.mxu0 0.0
  %90 = vmatprep.subr.mxu0 0.0
  %91 = vmatpush2.msra.mxu0 0.0
  %92 = vmatprep.subr.mxu0 0.0
  %93 = vmatpush2.msra.mxu0 0.0
  %94 = vmatprep.subr.mxu0 0.0
  %95 = vmatpush2.msra.mxu0 0.0
  %96 = vmatprep.subr.mxu0 0.0
  %97 = vmatpush2.msra.mxu0 0.0
  %98 = vmatprep.subr.mxu0 0.0
  %99 = vmatpush2.msra.mxu0 0.0
  %100 = vmatprep.subr.mxu0 0.0
  %101 = vmatpush2.msra.mxu0 0.0
  %102 = vmatprep.mubr.f32.mxu0 0.0
  %103 = vmatmul.mubr.f32.gmra.mxu0 %v36
  %v104 = vpop.f32.mrf.mxu0
  %v105 = vadd.f32 %v32, %v104
  %v106 = vpop.f32.mrf.mxu0
  %107 = vdwg.mxu0
  %v108 = vmax.f32 %v105, 0.0
  %v109 = vld [vmem:[%s3] sm:$0xff]
  %v110 = vld [vmem:[%s3 + $0x8] sm:$0xf]
  %v111 = vld [vmem:[#allocation2] sm:$0x1]
  %v113 = vlaneseq
  %v114 = vshrl.u32 %v113, 7
  %v115 = vsub.s32 0, %v114
  %v116 = vrot.slane %v111, %v115
  %vm118 = vcmask 97280
  %v120 = vsel %vm118, %v108, 0
  %vm122 = vcmask 1043456
  %v124 = vsel %vm122, %v110, 0
  %126 = vmatprep.subr.mxu0 0.0
  %127 = vmatpush1.msra.mxu0 0.0
  %128 = vmatprep.subr.mxu0 0.0
  %129 = vmatpush1.msra.mxu0 0.0
  %130 = vmatprep.subr.mxu0 0.0
  %131 = vmatpush1.msra.mxu0 0.0
  %132 = vmatprep.subr.mxu0 0.0
  %133 = vmatpush1.msra.mxu0 0.0
  %134 = vmatprep.subr.mxu0 0.0
  %135 = vmatpush1.msra.mxu0 0.0
  %136 = vmatprep.subr.mxu0 0.0
  %137 = vmatpush1.msra.mxu0 0.0
  %138 = vmatprep.subr.mxu0 0.0
  %139 = vmatpush1.msra.mxu0 0.0
  %140 = vmatprep.subr.mxu0 0.0
  %141 = vmatpush1.msra.mxu0 0.0
  %142 = vmatprep.subr.mxu0 0.0
  %143 = vmatpush1.msra.mxu0 0.0
  %144 = vmatprep.subr.mxu0 0.0
  %145 = vmatpush1.msra.mxu0 0.0
  %146 = vmatprep.subr.mxu0 0.0
  %147 = vmatpush1.msra.mxu0 0.0
  %148 = vmatprep.subr.mxu0 0.0
  %149 = vmatpush1.msra.mxu0 0.0
  %150 = vmatprep.subr.mxu0 0.0
  %151 = vmatpush1.msra.mxu0 0.0
  %152 = vmatprep.subr.mxu0 0.0
  %153 = vmatpush1.msra.mxu0 0.0
  %154 = vmatprep.subr.mxu0 0.0
  %155 = vmatpush1.msra.mxu0 %v124
  %156 = vmatprep.subr.mxu0 0.0
  %157 = vmatpush1.msra.mxu0 %v109
  %158 = vmatprep.subr.mxu0 0.0
  %159 = vmatpush2.msra.mxu0 0.0
  %160 = vmatprep.subr.mxu0 0.0
  %161 = vmatpush2.msra.mxu0 0.0
  %162 = vmatprep.subr.mxu0 0.0
  %163 = vmatpush2.msra.mxu0 0.0
  %164 = vmatprep.subr.mxu0 0.0
  %165 = vmatpush2.msra.mxu0 0.0
  %166 = vmatprep.subr.mxu0 0.0
  %167 = vmatpush2.msra.mxu0 0.0
  %168 = vmatprep.subr.mxu0 0.0
  %169 = vmatpush2.msra.mxu0 0.0
  %170 = vmatprep.subr.mxu0 0.0
  %171 = vmatpush2.msra.mxu0 0.0
  %172 = vmatprep.subr.mxu0 0.0
  %173 = vmatpush2.msra.mxu0 0.0
  %174 = vmatprep.subr.mxu0 0.0
  %175 = vmatpush2.msra.mxu0 0.0
  %176 = vmatprep.subr.mxu0 0.0
  %177 = vmatpush2.msra.mxu0 0.0
  %178 = vmatprep.subr.mxu0 0.0
  %179 = vmatpush2.msra.mxu0 0.0
  %180 = vmatprep.subr.mxu0 0.0
  %181 = vmatpush2.msra.mxu0 0.0
  %182 = vmatprep.subr.mxu0 0.0
  %183 = vmatpush2.msra.mxu0 0.0
  %184 = vmatprep.subr.mxu0 0.0
  %185 = vmatpush2.msra.mxu0 0.0
  %186 = vmatprep.subr.mxu0 0.0
  %187 = vmatpush2.msra.mxu0 0.0
  %188 = vmatprep.subr.mxu0 0.0
  %189 = vmatpush2.msra.mxu0 0.0
  %190 = vmatprep.mubr.f32.mxu0 0.0
  %191 = vmatmul.mubr.f32.gmra.mxu0 %v120
  %v192 = vpop.f32.mrf.mxu0
  %v193 = vadd.f32 %v116, %v192
  %v194 = vpop.f32.mrf.mxu0
  %195 = vdwg.mxu0
  %v196 = vmax.f32 %v193, -60.0
  %v197 = vmin.f32 %v196, 60.0
  %v198 = vsub.f32 0.0, %v197
  %v199 = vmul.f32 %v198, 1.442695
  %v200 = vpow.pop %v199
  %v201 = vadd.f32 %v200, 1.0
  %v202 = vrcp.pop %v201
  %v203 = vlaneseq
  %v204 = vand.u32 %v203, 127
  %vm205 = vcmp.eq.s32.totalorder %v204, 0
  %v206 = vsub.f32 1.0, %v202
  %208 = vset.pattern.permute.xlu0 0
  %209 = vperm.xlu0 %208, %v206
  %v210 = vpop.permute.xlu0 %209
  %213 = vset.pattern.permute.xlu0 0
  %214 = vperm.xlu0 %213, %v202
  %v215 = vpop.permute.xlu0 %214
  %v217 = vsel %vm205, %v210, %v215
  %vm218 = vcmask 15360
  %219 = vst.msk [vmem:[%s5] sm:$0xff] %vm218, %v217
  // Predicated region
  $region22: #{tpu_custom_call.1} parent=0 // pred_check
    _
  $region23: #{tpu_custom_call.1} parent=0 // pred_check_branch
    %221 = sbr.rel (0) target = $region25
  $region24: #{tpu_custom_call.1} parent=0 // pred_region
    _
  $region25: #{tpu_custom_call.1} parent=0 // pred_fallthru
    _
  // Predicated region
  $region26: #{tpu_custom_call.1} parent=0 // pred_check
    _
  $region27: #{tpu_custom_call.1} parent=0 // pred_check_branch
    %223 = sbr.rel (0) target = $region29
  $region28: #{tpu_custom_call.1} parent=0 // pred_region
    _
  $region29: #{tpu_custom_call.1} parent=0 // pred_fallthru
    _

</llo_original>
